<compile_context>
chip_gen: v5e
topology: v5e:2x2
jax: 0.10.0
libtpu: 0.0.40
codegen_flags: <defaults>
</compile_context>

<pallas_src>
import functools

import jax
import jax.numpy as jnp
from jax import lax
from jax.experimental import pallas as pl
from jax.experimental.pallas import tpu as pltpu


# ---------------------------------------------------------------------------
# Per-generation tiling / VMEM budget
# ---------------------------------------------------------------------------

@functools.lru_cache(maxsize=None)
def _tpu_budget():
    """(point-tile target, vmem_limit_bytes) for the current TPU generation."""
    vmem_bytes = 64 << 20
    try:
        vmem_bytes = int(pltpu.get_tpu_info().vmem_capacity_bytes)
    except Exception:           # interpret mode / unknown chip: stay conservative
        pass
    if vmem_bytes >= (96 << 20):        # v5e / v6e: 128 MiB physical VMEM
        return 2048, 100 << 20
    return 2048, 48 << 20               # v7x: 64 MiB physical VMEM


def _pick_tile(n, target):
    """Largest lane-legal point tile (multiple of 128) <= target dividing n."""
    if n <= target:
        return n                        # single full-width tile (always legal)
    for t in (target, 2048, 1024, 512, 256, 128):
        if t <= target and n % t == 0:
            return t
    # TODO(synk): pad N to a multiple of 128 (with -inf masking in the max
    # kernels and the per-point log-softmax) for point counts like 2500 that
    # have no 128-divisor; today they run as one big un-pipelined tile.
    return n


def _point_split(batch, num_tiles):
    """Split the point-tile range into 2 partial-max accumulators when the batch
    alone cannot occupy both v7x TensorCores (no effect on single-TC chips)."""
    if batch >= 2 or num_tiles % 2 != 0:
        return 1
    return 2


# ---------------------------------------------------------------------------
# Pallas kernels
# ---------------------------------------------------------------------------

def _dot(a, w):
    """bf16 x bf16 MXU matmul with f32 accumulation."""
    return jnp.dot(a.astype(jnp.bfloat16), w, preferred_element_type=jnp.float32)


def _dot_t(a_cn, w):
    """a_cn^T @ w on the MXU, contracting dim 0 of both operands.
    Consumes the channels-first (C, tile_n) point block exactly as loaded, so
    neither HBM nor VMEM ever holds a lane-width-C transposed copy. The K=C(<=3)
    contraction is negligible, so it stays in f32."""
    return lax.dot_general(a_cn, w.astype(jnp.float32),
                           dimension_numbers=(((0,), (0,)), ((), ())),
                           preferred_element_type=jnp.float32)


def _conv3_max_kernel(x_ref, w1, b1, w2, b2, w3, b3, o_ref):
    """3 fused point-wise conv+BN+ReLU layers + running max over the point tile."""
    @pl.when(pl.program_id(2) == 0)
    def _init():
        o_ref[...] = jnp.full_like(o_ref, -jnp.inf)

    h = jnp.maximum(_dot_t(x_ref[0], w1[...]) + b1[...], 0.0)     # (TN, 64)
    h = jnp.maximum(_dot(h, w2[...]) + b2[...], 0.0)
    h = jnp.maximum(_dot(h, w3[...]) + b3[...], 0.0)
    tile_max = jnp.max(h, axis=0, keepdims=True)[None]            # (1, 1, C)
    o_ref[...] = jnp.maximum(o_ref[...], tile_max)


def _stn_fc_kernel(x_ref, w1, b1, w2, b2, w3, b3, iden_ref, o_ref):
    """STN regression head: fc1/fc2 (+BN+ReLU) -> fc3, plus identity offset."""
    h = jnp.maximum(_dot(x_ref[...], w1[...]) + b1[...], 0.0)
    h = jnp.maximum(_dot(h, w2[...]) + b2[...], 0.0)
    o_ref[...] = _dot(h, w3[...]) + b3[...] + iden_ref[...]


def _stage1_kernel(x_ref, wf_ref, be1_ref,
                   wc1, bc1, wc2, bc2, wc3, bc3,
                   h1_ref, fmax_ref):
    """conv1 (3x3 input transform pre-folded into its weight) -> h1;
    feature-STN conv chain + running max, all in one pass over the point tile."""
    @pl.when(pl.program_id(2) == 0)
    def _init():
        fmax_ref[...] = jnp.full_like(fmax_ref, -jnp.inf)

    h1 = jnp.maximum(_dot_t(x_ref[0], wf_ref[0]) + be1_ref[...], 0.0)   # (TN, 64)
    h1b = h1.astype(jnp.bfloat16)
    h1_ref[...] = h1b[None]

    h = jnp.maximum(jnp.dot(h1b, wc1[...], preferred_element_type=jnp.float32)
                    + bc1[...], 0.0)
    h = jnp.maximum(_dot(h, wc2[...]) + bc2[...], 0.0)
    h = jnp.maximum(_dot(h, wc3[...]) + bc3[...], 0.0)
    tile_max = jnp.max(h, axis=0, keepdims=True)[None]
    fmax_ref[...] = jnp.maximum(fmax_ref[...], tile_max)


def _global_feat_kernel(h1_ref, w2f_ref, b2, w3, b3, o_ref):
    """conv2 (feature transform pre-folded, +ReLU) + conv3 (no ReLU) + running max."""
    @pl.when(pl.program_id(2) == 0)
    def _init():
        o_ref[...] = jnp.full_like(o_ref, -jnp.inf)

    h = jnp.maximum(jnp.dot(h1_ref[0], w2f_ref[0],
                            preferred_element_type=jnp.float32) + b2[...], 0.0)
    h = _dot(h, w3[...]) + b3[...]
    tile_max = jnp.max(h, axis=0, keepdims=True)[None]
    o_ref[...] = jnp.maximum(o_ref[...], tile_max)


def _seg_head_kernel(h1_ref, w1f_ref, gb_ref,
                     w2, b2, w3, b3, w4, b4,
                     o_ref, *, n_classes):
    """seg MLP (s1..s4, feature transform pre-folded into s1) + masked log-softmax."""
    # s1: point half of the (1088,512) GEMM; the global half (+ its bias) comes
    # in as the per-batch vector gb_ref -> no (B,N,1088) concat is materialized.
    h = jnp.maximum(jnp.dot(h1_ref[0], w1f_ref[0],
                            preferred_element_type=jnp.float32) + gb_ref[0], 0.0)
    h = jnp.maximum(_dot(h, w2[...]) + b2[...], 0.0)
    h = jnp.maximum(_dot(h, w3[...]) + b3[...], 0.0)
    logits = _dot(h, w4[...]) + b4[...]                           # (TN, NCpad)

    col = lax.broadcasted_iota(jnp.int32, logits.shape, 1)
    valid = col < n_classes
    z = jnp.where(valid, logits, -1e30)
    m = jnp.max(z, axis=-1, keepdims=True)
    y = z - m
    lse = jnp.log(jnp.sum(jnp.where(valid, jnp.exp(y), 0.0),
                          axis=-1, keepdims=True))
    # log-softmax math stays f32; only the final store is bf16 (halves the
    # HBM write of the widest per-point tensor in the network).
    o_ref[...] = (y - lse).astype(o_ref.dtype)[None]


# ---------------------------------------------------------------------------
# pallas_call wrappers
# ---------------------------------------------------------------------------

def conv3_max(x, l1, l2, l3, tile_n, vmem_limit):
    """x (B, Cin, N) channels-first -> (B, Cout): fused 3-conv chain + point max."""
    B, Cin, N = x.shape
    (w1, b1), (w2, b2), (w3, b3) = l1, l2, l3
    Cout = w3.shape[1]
    nt = N // tile_n
    S = _point_split(B, nt)
    nts = nt // S
    full = lambda a: pl.BlockSpec(a.shape, lambda b, s, n: (0, 0))
    out = pl.pallas_call(
        _conv3_max_kernel,
        grid=(B, S, nts),
        in_specs=[
            pl.BlockSpec((1, Cin, tile_n), lambda b, s, n: (b, 0, s * nts + n)),
            full(w1), full(b1), full(w2), full(b2), full(w3), full(b3),
        ],
        out_specs=pl.BlockSpec((1, 1, Cout), lambda b, s, n: (b * S + s, 0, 0)),
        out_shape=jax.ShapeDtypeStruct((B * S, 1, Cout), jnp.float32),
        compiler_params=pltpu.CompilerParams(
            dimension_semantics=("parallel", "parallel", "arbitrary"),
            vmem_limit_bytes=vmem_limit),
    )(x, w1, b1, w2, b2, w3, b3)
    return jnp.max(out.reshape(B, S, Cout), axis=1)      # combine partial maxes


def stn_fc(x, l1, l2, l3, k):
    """x (B, 1024) -> (B, k, k): fused STN regression head + identity."""
    B = x.shape[0]
    (w1, b1), (w2, b2), (w3, b3) = l1, l2, l3
    iden = jnp.eye(k, dtype=jnp.float32).reshape(1, k * k)
    full = lambda a: pl.BlockSpec(a.shape, lambda i: (0, 0))
    out = pl.pallas_call(
        _stn_fc_kernel,
        grid=(1,),
        in_specs=[full(x), full(w1), full(b1), full(w2), full(b2),
                  full(w3), full(b3), full(iden)],
        out_specs=pl.BlockSpec((B, k * k), lambda i: (0, 0)),
        out_shape=jax.ShapeDtypeStruct((B, k * k), jnp.float32),
    )(x, w1, b1, w2, b2, w3, b3, iden)
    return out.reshape(B, k, k)


def stage1_e1_fstn(x, trans, e1, fstn, tile_n, vmem_limit):
    """Input transform folded into conv1; conv1 -> h1 (bf16); feature-STN conv
    chain + max fused in the same pass over each point tile."""
    B, Cin, N = x.shape
    w_e1, b_e1 = e1
    # Tiny per-batch weight fold (glue): (x^T @ trans) @ W == x^T @ (trans @ W).
    wf = jnp.einsum("bij,jk->bik", trans,
                    w_e1.astype(jnp.float32)).astype(jnp.bfloat16)    # (B, Cin, 64)
    (wc1, bc1), (wc2, bc2), (wc3, bc3) = fstn["c1"], fstn["c2"], fstn["c3"]
    nt = N // tile_n
    S = _point_split(B, nt)
    nts = nt // S
    full = lambda a: pl.BlockSpec(a.shape, lambda b, s, n: (0, 0))
    h1, fpre = pl.pallas_call(
        _stage1_kernel,
        grid=(B, S, nts),
        in_specs=[
            pl.BlockSpec((1, Cin, tile_n), lambda b, s, n: (b, 0, s * nts + n)),
            pl.BlockSpec((1, Cin, w_e1.shape[1]), lambda b, s, n: (b, 0, 0)),
            full(b_e1),
            full(wc1), full(bc1), full(wc2), full(bc2), full(wc3), full(bc3),
        ],
        out_specs=(
            pl.BlockSpec((1, tile_n, 64), lambda b, s, n: (b, s * nts + n, 0)),
            pl.BlockSpec((1, 1, 1024), lambda b, s, n: (b * S + s, 0, 0)),
        ),
        out_shape=(
            jax.ShapeDtypeStruct((B, N, 64), jnp.bfloat16),
            jax.ShapeDtypeStruct((B * S, 1, 1024), jnp.float32),
        ),
        compiler_params=pltpu.CompilerParams(
            dimension_semantics=("parallel", "parallel", "arbitrary"),
            vmem_limit_bytes=vmem_limit),
    )(x, wf, b_e1, wc1, bc1, wc2, bc2, wc3, bc3)
    return h1, jnp.max(fpre.reshape(B, S, 1024), axis=1)


def global_feature(h1, trans_feat, e2, e3, tile_n, vmem_limit):
    """h1 (B,N,64) bf16 -> (B,1024): (folded feature transform +) conv2 + conv3 + max."""
    B, N, _ = h1.shape
    (w2, b2), (w3, b3) = e2, e3
    # Fold trans_feat into conv2: (h1 @ tf) @ W2 == h1 @ (tf @ W2). Kills the
    # worst-shaped (tile_n,64)@(64,64) MXU op and the per-step tf cast.
    w2f = jnp.einsum("bij,jk->bik", trans_feat,
                     w2.astype(jnp.float32)).astype(jnp.bfloat16)     # (B, 64, 128)
    nt = N // tile_n
    S = _point_split(B, nt)
    nts = nt // S
    full = lambda a: pl.BlockSpec(a.shape, lambda b, s, n: (0, 0))
    out = pl.pallas_call(
        _global_feat_kernel,
        grid=(B, S, nts),
        in_specs=[
            pl.BlockSpec((1, tile_n, 64), lambda b, s, n: (b, s * nts + n, 0)),
            pl.BlockSpec((1, 64, w2.shape[1]), lambda b, s, n: (b, 0, 0)),
            full(b2), full(w3), full(b3),
        ],
        out_specs=pl.BlockSpec((1, 1, 1024), lambda b, s, n: (b * S + s, 0, 0)),
        out_shape=jax.ShapeDtypeStruct((B * S, 1, 1024), jnp.float32),
        compiler_params=pltpu.CompilerParams(
            dimension_semantics=("parallel", "parallel", "arbitrary"),
            vmem_limit_bytes=vmem_limit),
    )(h1, w2f, b2, w3, b3)
    return jnp.max(out.reshape(B, S, 1024), axis=1)


def seg_head(h1, trans_feat, gbias, w_s1p, s2, s3, s4, n_classes, tile_n, vmem_limit):
    """Fused seg MLP + log-softmax per point tile; bf16 output, 128-lane padded."""
    B, N, _ = h1.shape
    (w2, b2), (w3, b3) = s2, s3
    w4, b4 = s4
    ncp = w4.shape[1]
    # Fold trans_feat into s1's point half: (h1 @ tf) @ W1p == h1 @ (tf @ W1p).
    w1f = jnp.einsum("bij,jk->bik", trans_feat,
                     w_s1p.astype(jnp.float32)).astype(jnp.bfloat16)  # (B, 64, 512)
    gb3 = gbias.reshape(B, 1, gbias.shape[1])
    full = lambda a: pl.BlockSpec(a.shape, lambda b, n: (0, 0))
    out = pl.pallas_call(
        functools.partial(_seg_head_kernel, n_classes=n_classes),
        grid=(B, N // tile_n),
        in_specs=[
            pl.BlockSpec((1, tile_n, 64), lambda b, n: (b, n, 0)),
            pl.BlockSpec((1, 64, w_s1p.shape[1]), lambda b, n: (b, 0, 0)),
            pl.BlockSpec((1, 1, gb3.shape[2]), lambda b, n: (b, 0, 0)),
            full(w2), full(b2), full(w3), full(b3), full(w4), full(b4),
        ],
        out_specs=pl.BlockSpec((1, tile_n, ncp), lambda b, n: (b, n, 0)),
        out_shape=jax.ShapeDtypeStruct((B, N, ncp), jnp.bfloat16),
        compiler_params=pltpu.CompilerParams(
            dimension_semantics=("parallel", "parallel"),
            vmem_limit_bytes=vmem_limit),
    )(h1, w1f, gb3, w2, b2, w3, b3, w4, b4)
    return out      # 128-lane padded; caller decides whether to slice


# ---------------------------------------------------------------------------
# Parameter construction (deterministic, synthetic; BN folded in eval mode)
# ---------------------------------------------------------------------------

def _fold_bn(w, b, gamma, beta, mean=0.0, var=1.0, eps=1e-5):
    """Fold eval-mode BatchNorm1d (arbitrary running stats) into the preceding
    1x1 conv / linear:  y = conv(x)*scale + (b - mean)*scale + beta."""
    scale = gamma / jnp.sqrt(var + eps)
    return w * scale[None, :], ((b - mean) * scale + beta)[None, :]


def _layer(key, cin, cout, bn=True):
    kw, kb, kg, kbt = jax.random.split(key, 4)
    w = jax.random.normal(kw, (cin, cout), jnp.float32) / jnp.sqrt(float(cin))
    b = jax.random.normal(kb, (cout,), jnp.float32) * 0.01
    if bn:
        gamma = 0.5 + 0.1 * jnp.abs(jax.random.normal(kg, (cout,), jnp.float32))
        beta = jax.random.normal(kbt, (cout,), jnp.float32) * 0.01
        w, b = _fold_bn(w, b, gamma, beta)     # synthetic stats: mean=0, var=1
    else:
        b = b[None, :]
    # Weights in bf16 (halves HBM/VMEM traffic, doubles MXU rate); biases f32.
    return w.astype(jnp.bfloat16), b.astype(jnp.float32)


def init_stn(key, cin, k):
    ks = jax.random.split(key, 6)
    return {
        "c1": _layer(ks[0], cin, 64),
        "c2": _layer(ks[1], 64, 128),
        "c3": _layer(ks[2], 128, 1024),
        "f1": _layer(ks[3], 1024, 512),
        "f2": _layer(ks[4], 512, 256),
        "f3": _layer(ks[5], 256, k * k, bn=False),
        "k": k,
    }


def init_pointnet(key, n_classes, info_channel=0):
    # TODO(synk): info_channel > 0 coordinate/feature split (only coords get the
    # 3x3 transform) is not implemented; the demo uses info_channel=0.
    cin = 3 + info_channel
    ks = jax.random.split(key, 9)
    w_s1, b_s1 = _layer(ks[5], 1088, 512)
    w_s4, b_s4 = _layer(ks[8], 128, n_classes, bn=False)
    ncp = ((n_classes + 127) // 128) * 128          # pad classifier to 128 lanes
    w_s4p = jnp.zeros((128, ncp), jnp.bfloat16).at[:, :n_classes].set(w_s4)
    b_s4p = jnp.zeros((1, ncp), jnp.float32).at[:, :n_classes].set(b_s4)
    return {
        "stn": init_stn(ks[0], cin, 3),             # input (spatial) transform net
        "fstn": init_stn(ks[1], 64, 64),            # feature transform net
        "e1": _layer(ks[2], cin, 64),
        "e2": _layer(ks[3], 64, 128),
        "e3": _layer(ks[4], 128, 1024),
        # s1 acts on cat([global(1024), pointfeat(64)]); split it so the global
        # half becomes one per-batch GEMM and the concat is never materialized.
        "s1_global": (w_s1[:1024], b_s1),
        "s1_point": w_s1[1024:],
        "s2": _layer(ks[6], 512, 256),
        "s3": _layer(ks[7], 256, 128),
        "s4": (w_s4p, b_s4p),
        "n_classes": n_classes,
    }


# ---------------------------------------------------------------------------
# Forward pass (mirrors PointNet / PointNetEncoder semantics)
# ---------------------------------------------------------------------------

def pointnet_forward(p, x, tile_n=None, trim_output=True):
    """x: (B, C, N) (PyTorch NCW) -> (log_probs (B, N, n_classes), trans_feat).

    With trim_output=False the first return value is the 128-lane-padded bf16
    tensor (B, N, ceil(n_classes/128)*128); padded lanes hold ~-1e30. Consumers
    that fuse the per-point class gather / NLL should use that form to skip the
    extra HBM pass the trailing slice costs."""
    B, _, N = x.shape
    tile_target, vmem_limit = _tpu_budget()
    if tile_n is None:
        tile_n = _pick_tile(N, tile_target)

    # --- input STN -> 3x3 transform ---
    stn = p["stn"]
    spre = conv3_max(x, stn["c1"], stn["c2"], stn["c3"], tile_n, vmem_limit)
    trans = stn_fc(spre, stn["f1"], stn["f2"], stn["f3"], stn["k"])        # (B,3,3)

    # --- conv1 (input transform folded into its weight) + feature STN ---
    fstn = p["fstn"]
    h1, fpre = stage1_e1_fstn(x, trans, p["e1"], fstn, tile_n, vmem_limit)
    trans_feat = stn_fc(fpre, fstn["f1"], fstn["f2"], fstn["f3"], fstn["k"])  # (B,64,64)

    # --- global feature: (folded feature transform) + conv2 + conv3 + max ---
    gfeat = global_feature(h1, trans_feat, p["e2"], p["e3"], tile_n, vmem_limit)

    # --- per-batch global half of seg conv1: tiny (B,1024)@(1024,512); plain
    # XLA dot (drops a whole pallas_call and its HBM staging round trip) ---
    w_s1g, b_s1 = p["s1_global"]
    gbias = jnp.dot(gfeat.astype(jnp.bfloat16), w_s1g,
                    preferred_element_type=jnp.float32) + b_s1             # (B,512)

    # --- seg head + fused log-softmax (bf16, lane-dense stores) ---
    logp = seg_head(h1, trans_feat, gbias, p["s1_point"], p["s2"], p["s3"],
                    p["s4"], p["n_classes"], tile_n, vmem_limit)
    if trim_output:
        logp = logp[:, :, :p["n_classes"]]
    return logp, trans_feat


# ---------------------------------------------------------------------------

if __name__ == "__main__":
    key = jax.random.PRNGKey(0)
    kp, kx1, kx2 = jax.random.split(key, 3)

    n_classes = 4
    params = init_pointnet(kp, n_classes, info_channel=0)

    # Case 1: small demo shapes (single point tile per batch).
    B, N = 2, 16
    x = jax.random.normal(kx1, (B, 3, N), jnp.float32)   # PyTorch layout (B, C, N)
    logp, trans_feat = pointnet_forward(params, x)
    jax.block_until_ready((logp, trans_feat))
    assert logp.shape == (B, N, n_classes)
    assert trans_feat.shape == (B, 64, 64)
    assert bool(jnp.all(jnp.isfinite(logp.astype(jnp.float32))))
    assert bool(jnp.allclose(jnp.sum(jnp.exp(logp.astype(jnp.float32)), axis=-1),
                             1.0, atol=3e-2))

    # Case 2: B=1 with 2 point tiles -> exercises the split-point partial-max
    # path that keeps both v7x TensorCores busy when the batch is tiny.
    B2, N2 = 1, 256
    x2 = jax.random.normal(kx2, (B2, 3, N2), jnp.float32)
    logp2, tf2 = pointnet_forward(params, x2, tile_n=128)
    jax.block_until_ready((logp2, tf2))
    assert logp2.shape == (B2, N2, n_classes)
    assert tf2.shape == (B2, 64, 64)
    assert bool(jnp.all(jnp.isfinite(logp2.astype(jnp.float32))))
    assert bool(jnp.allclose(jnp.sum(jnp.exp(logp2.astype(jnp.float32)), axis=-1),
                             1.0, atol=3e-2))

    print("KERNEL_OK")
</pallas_src>

<mosaic_0001>
module attributes {stable_mosaic.version = 11 : i64} {
  func.func @_conv3_max_kernel(%arg0: i32, %arg1: i32, %arg2: i32, %arg3: memref<1x3x16xf32, #tpu.memory_space<vmem>>, %arg4: memref<3x64xbf16, #tpu.memory_space<vmem>>, %arg5: memref<1x64xf32, #tpu.memory_space<vmem>>, %arg6: memref<64x128xbf16, #tpu.memory_space<vmem>>, %arg7: memref<1x128xf32, #tpu.memory_space<vmem>>, %arg8: memref<128x1024xbf16, #tpu.memory_space<vmem>>, %arg9: memref<1x1024xf32, #tpu.memory_space<vmem>>, %arg10: memref<1x1x1024xf32, #tpu.memory_space<vmem>>) attributes {dimension_semantics = [#tpu.dimension_semantics<parallel>, #tpu.dimension_semantics<parallel>, #tpu.dimension_semantics<arbitrary>], iteration_bounds = array<i64: 2, 1, 1>, scalar_prefetch = 0 : i64, scratch_operands = 0 : i64, tpu.core_type = #tpu.core_type<tc>, window_params = [{transform_indices = @transform_0, window_bounds = array<i64: 1, 3, 16>}, {pipeline_mode = #tpu.pipeline_mode<synchronous>, transform_indices = @transform_1, window_bounds = array<i64: 3, 64>}, {pipeline_mode = #tpu.pipeline_mode<synchronous>, transform_indices = @transform_2, window_bounds = array<i64: 1, 64>}, {pipeline_mode = #tpu.pipeline_mode<synchronous>, transform_indices = @transform_3, window_bounds = array<i64: 64, 128>}, {pipeline_mode = #tpu.pipeline_mode<synchronous>, transform_indices = @transform_4, window_bounds = array<i64: 1, 128>}, {pipeline_mode = #tpu.pipeline_mode<synchronous>, transform_indices = @transform_5, window_bounds = array<i64: 128, 1024>}, {pipeline_mode = #tpu.pipeline_mode<synchronous>, transform_indices = @transform_6, window_bounds = array<i64: 1, 1024>}, {transform_indices = @transform_7, window_bounds = array<i64: 1, 1, 1024>}]} {
    %c0_i32 = arith.constant 0 : i32
    %0 = arith.cmpi eq, %arg2, %c0_i32 : i32
    %1 = arith.extui %0 : i1 to i32
    %c0_i32_0 = arith.constant 0 : i32
    %2 = arith.cmpi ne, %1, %c0_i32_0 : i32
    scf.if %2 {
      %cst_27 = arith.constant 0xFF800000 : f32
      %35 = vector.broadcast %cst_27 : f32 to vector<1x1x1024xf32>
      %c0_28 = arith.constant 0 : index
      %c0_29 = arith.constant 0 : index
      %c0_30 = arith.constant 0 : index
      %36 = vector.load %arg10[%c0_28, %c0_29, %c0_30] : memref<1x1x1024xf32, #tpu.memory_space<vmem>>, vector<1x1x1024xf32>
      tpu.vector_store %arg10[%c0_28, %c0_29, %c0_30], %35 {strides = array<i32>} : memref<1x1x1024xf32, #tpu.memory_space<vmem>>, vector<1x1x1024xf32>,
    } else {
    }
    %c0 = arith.constant 0 : index
    %c0_1 = arith.constant 0 : index
    %c0_2 = arith.constant 0 : index
    %3 = vector.load %arg3[%c0, %c0_1, %c0_2] : memref<1x3x16xf32, #tpu.memory_space<vmem>>, vector<1x3x16xf32>
    %4 = vector.shape_cast %3 : vector<1x3x16xf32> to vector<3x16xf32>
    %c0_3 = arith.constant 0 : index
    %c0_4 = arith.constant 0 : index
    %5 = vector.load %arg4[%c0_3, %c0_4] : memref<3x64xbf16, #tpu.memory_space<vmem>>, vector<3x64xbf16>
    %6 = arith.extf %5 : vector<3x64xbf16> to vector<3x64xf32>
    %cst = arith.constant dense<0.000000e+00> : vector<16x64xf32>
    %7 = tpu.matmul %4, %6, %cst {dimension_numbers = #tpu.dot_dimension_numbers<[0], [0], [1], [1], [0, 1, 1, 1], [], []>} : vector<3x16xf32>, vector<3x64xf32>, vector<16x64xf32> -> vector<16x64xf32>
    %c0_5 = arith.constant 0 : index
    %c0_6 = arith.constant 0 : index
    %8 = vector.load %arg5[%c0_5, %c0_6] : memref<1x64xf32, #tpu.memory_space<vmem>>, vector<1x64xf32>
    %9 = vector.broadcast %8 : vector<1x64xf32> to vector<16x64xf32>
    %10 = arith.addf %7, %9 : vector<16x64xf32>
    %cst_7 = arith.constant 0.000000e+00 : f32
    %11 = vector.broadcast %cst_7 : f32 to vector<16x64xf32>
    %12 = arith.maximumf %10, %11 : vector<16x64xf32>
    %c0_8 = arith.constant 0 : index
    %c0_9 = arith.constant 0 : index
    %13 = vector.load %arg6[%c0_8, %c0_9] : memref<64x128xbf16, #tpu.memory_space<vmem>>, vector<64x128xbf16>
    %14 = arith.truncf %12 : vector<16x64xf32> to vector<16x64xbf16>
    %cst_10 = arith.constant dense<0.000000e+00> : vector<16x128xf32>
    %15 = tpu.matmul %14, %13, %cst_10 {dimension_numbers = #tpu.dot_dimension_numbers<[1], [0], [0], [1], [0, 0, 1, 1], [], []>} : vector<16x64xbf16>, vector<64x128xbf16>, vector<16x128xf32> -> vector<16x128xf32>
    %c0_11 = arith.constant 0 : index
    %c0_12 = arith.constant 0 : index
    %16 = vector.load %arg7[%c0_11, %c0_12] : memref<1x128xf32, #tpu.memory_space<vmem>>, vector<1x128xf32>
    %17 = vector.broadcast %16 : vector<1x128xf32> to vector<16x128xf32>
    %18 = arith.addf %15, %17 : vector<16x128xf32>
    %cst_13 = arith.constant 0.000000e+00 : f32
    %19 = vector.broadcast %cst_13 : f32 to vector<16x128xf32>
    %20 = arith.maximumf %18, %19 : vector<16x128xf32>
    %c0_14 = arith.constant 0 : index
    %c0_15 = arith.constant 0 : index
    %21 = vector.load %arg8[%c0_14, %c0_15] : memref<128x1024xbf16, #tpu.memory_space<vmem>>, vector<128x1024xbf16>
    %22 = arith.truncf %20 : vector<16x128xf32> to vector<16x128xbf16>
    %cst_16 = arith.constant dense<0.000000e+00> : vector<16x1024xf32>
    %23 = tpu.matmul %22, %21, %cst_16 {dimension_numbers = #tpu.dot_dimension_numbers<[1], [0], [0], [1], [0, 0, 1, 1], [], []>} : vector<16x128xbf16>, vector<128x1024xbf16>, vector<16x1024xf32> -> vector<16x1024xf32>
    %c0_17 = arith.constant 0 : index
    %c0_18 = arith.constant 0 : index
    %24 = vector.load %arg9[%c0_17, %c0_18] : memref<1x1024xf32, #tpu.memory_space<vmem>>, vector<1x1024xf32>
    %25 = vector.broadcast %24 : vector<1x1024xf32> to vector<16x1024xf32>
    %26 = arith.addf %23, %25 : vector<16x1024xf32>
    %cst_19 = arith.constant 0.000000e+00 : f32
    %27 = vector.broadcast %cst_19 : f32 to vector<16x1024xf32>
    %28 = arith.maximumf %26, %27 : vector<16x1024xf32>
    %cst_20 = arith.constant dense<0xFF800000> : vector<1024xf32>
    %29 = vector.multi_reduction <maximumf>, %28, %cst_20 [0] : vector<16x1024xf32> to vector<1024xf32>
    %30 = vector.shape_cast %29 : vector<1024xf32> to vector<1x1024xf32>
    %31 = vector.shape_cast %30 : vector<1x1024xf32> to vector<1x1x1024xf32>
    %c0_21 = arith.constant 0 : index
    %c0_22 = arith.constant 0 : index
    %c0_23 = arith.constant 0 : index
    %32 = vector.load %arg10[%c0_21, %c0_22, %c0_23] : memref<1x1x1024xf32, #tpu.memory_space<vmem>>, vector<1x1x1024xf32>
    %33 = arith.maximumf %32, %31 : vector<1x1x1024xf32>
    %c0_24 = arith.constant 0 : index
    %c0_25 = arith.constant 0 : index
    %c0_26 = arith.constant 0 : index
    %34 = vector.load %arg10[%c0_24, %c0_25, %c0_26] : memref<1x1x1024xf32, #tpu.memory_space<vmem>>, vector<1x1x1024xf32>
    tpu.vector_store %arg10[%c0_24, %c0_25, %c0_26], %33 {strides = array<i32>} : memref<1x1x1024xf32, #tpu.memory_space<vmem>>, vector<1x1x1024xf32>,
    return
  }
  func.func @transform_0(%arg0: i32, %arg1: i32, %arg2: i32) -> (i32, i32, i32) {
    %c1_i32 = arith.constant 1 : i32
    %0 = arith.muli %arg1, %c1_i32 : i32
    %1 = arith.addi %0, %arg2 : i32
    %c0_i32 = arith.constant 0 : i32
    %c0_i32_0 = arith.constant 0 : i32
    return %arg0, %c0_i32, %1 : i32, i32, i32
  }
  func.func @transform_1(%arg0: i32, %arg1: i32, %arg2: i32) -> (i32, i32) {
    %c0_i32 = arith.constant 0 : i32
    %c0_i32_0 = arith.constant 0 : i32
    %c0_i32_1 = arith.constant 0 : i32
    return %c0_i32, %c0_i32_0 : i32, i32
  }
  func.func @transform_2(%arg0: i32, %arg1: i32, %arg2: i32) -> (i32, i32) {
    %c0_i32 = arith.constant 0 : i32
    %c0_i32_0 = arith.constant 0 : i32
    %c0_i32_1 = arith.constant 0 : i32
    return %c0_i32, %c0_i32_0 : i32, i32
  }
  func.func @transform_3(%arg0: i32, %arg1: i32, %arg2: i32) -> (i32, i32) {
    %c0_i32 = arith.constant 0 : i32
    %c0_i32_0 = arith.constant 0 : i32
    %c0_i32_1 = arith.constant 0 : i32
    return %c0_i32, %c0_i32_0 : i32, i32
  }
  func.func @transform_4(%arg0: i32, %arg1: i32, %arg2: i32) -> (i32, i32) {
    %c0_i32 = arith.constant 0 : i32
    %c0_i32_0 = arith.constant 0 : i32
    %c0_i32_1 = arith.constant 0 : i32
    return %c0_i32, %c0_i32_0 : i32, i32
  }
  func.func @transform_5(%arg0: i32, %arg1: i32, %arg2: i32) -> (i32, i32) {
    %c0_i32 = arith.constant 0 : i32
    %c0_i32_0 = arith.constant 0 : i32
    %c0_i32_1 = arith.constant 0 : i32
    return %c0_i32, %c0_i32_0 : i32, i32
  }
  func.func @transform_6(%arg0: i32, %arg1: i32, %arg2: i32) -> (i32, i32) {
    %c0_i32 = arith.constant 0 : i32
    %c0_i32_0 = arith.constant 0 : i32
    %c0_i32_1 = arith.constant 0 : i32
    return %c0_i32, %c0_i32_0 : i32, i32
  }
  func.func @transform_7(%arg0: i32, %arg1: i32, %arg2: i32) -> (i32, i32, i32) {
    %c1_i32 = arith.constant 1 : i32
    %0 = arith.muli %arg0, %c1_i32 : i32
    %1 = arith.addi %0, %arg1 : i32
    %c0_i32 = arith.constant 0 : i32
    %c0_i32_0 = arith.constant 0 : i32
    %c0_i32_1 = arith.constant 0 : i32
    return %1, %c0_i32, %c0_i32_0 : i32, i32, i32
  }
}

</mosaic_0001>

<llo_original>
// kernel: tpu_custom_call.1
$region0: #{tpu_custom_call.1}
  #allocation0 [shape = 'u32[]', space=smem, size = 0x4, offset = 0x4, fixed_abs, tag = 'smem constant byte address 0x4 - core index']
  #allocation1 [shape = 'u32[72,128]{1,0:T(1,128)}', space=vmem, size = 0x9000, scoped, tag = 'internal scratch']
  %s0 = inlined_call_operand.vmem [shape: f32[2,3,16], index: 0, kind: input, shape index: {}]
  %s1 = inlined_call_operand.vmem [shape: bf16[3,64], index: 1, kind: input, shape index: {}]
  %s2 = inlined_call_operand.vmem [shape: f32[1,64], index: 2, kind: input, shape index: {}]
  %s3 = inlined_call_operand.hbm [shape: bf16[64,128], index: 3, kind: input, shape index: {}]
  %s4 = inlined_call_operand.vmem [shape: f32[1,128], index: 4, kind: input, shape index: {}]
  %s5 = inlined_call_operand.hbm [shape: bf16[128,1024], index: 5, kind: input, shape index: {}]
  %s6 = inlined_call_operand.vmem [shape: f32[1,1024], index: 6, kind: input, shape index: {}]
  %s7 = inlined_call_operand.hbm [shape: f32[2,1,1024], index: 7, kind: output, shape index: {}]
  %s8 = sld [smem:[#allocation0]]
  $region73: #{tpu_custom_call.1} parent=0
    _
  %s10 = ssub.s32 1, %s8
  %s11 = scalar_select 0, %s10, %s8
  $region1: #{tpu_custom_call.1} parent=0
    #allocation2 [shape = 'u8[16384]{0}', space=vmem, size = 0x4000, scoped, tag = 'input window, operand 3, single buffered']
    #allocation3 [shape = 's32[2]{0}', space=sflag, size = 0x8, scoped, tag = 'scoped memory for tpu_custom_call.1']
    #allocation4 [shape = 's32[2]{0}', space=sflag, size = 0x8, scoped, tag = 'scoped memory for tpu_custom_call.1']
    #allocation5 [shape = 'u8[262144]{0}', space=vmem, size = 0x40000, scoped, tag = 'input window, operand 5, single buffered']
    #allocation6 [shape = 's32[1]{0}', space=sflag, size = 0x4, scoped, tag = 'scoped memory for tpu_custom_call.1']
    #allocation7 [shape = 'u8[8192]{0}', space=vmem, size = 0x2000, scoped, tag = 'output window, operand 0']
    %12 = vsyncpa [#allocation3], 0
    %13 = vsyncpa [#allocation6], 0
    %14 = vsyncpa [#allocation4], 0
    %s15 = scalar_lea.sflag [#allocation4], 1
    %16 = vsyncpa %s15, 0
    loop: start=0, step=1, limit=4
    $region2: #{tpu_custom_call.1} parent=1 // loop_pre_header
      _
    $region3: #{tpu_custom_call.1} parent=1 // loop_header
      %s18 = sphi 0, %s22
      %p19 = scmp.ge.s32.totalorder %s18, 4
      %s25 = sphi 0, %s44
      %s26 = sphi 0, %s40
      %s27 = sphi 0, %s36
      %s28 = sphi 0, %s25
      %s29 = sphi 0, %s26
      %s30 = sphi 0, %s27
      %s31 = sphi 0, %s28
      %s32 = sphi 0, %s29
      %s33 = sphi 0, %s30
      %s51 = sphi 0, %s53
      %s54 = sphi 0, %s51
      %s55 = sphi 0, %s54
      %s71 = sphi 0, %s55
      %s75 = sphi 0, %s75
      %s77 = sphi 0, %s75
      %s78 = sphi 0, %s77
      %s92 = sphi 0, %s78
      %s96 = sphi 0, %s96
      %s98 = sphi 0, %s96
      %s99 = sphi 0, %s98
      %s113 = sphi 0, %s99
      %s117 = sphi 0, %s117
      %s119 = sphi 0, %s117
      %s120 = sphi 0, %s119
      %s134 = sphi 0, %s120
      %s138 = sphi 0, %s138
      %s140 = sphi 0, %s138
      %s141 = sphi 0, %s140
      %s155 = sphi 0, %s141
      %s159 = sphi 0, %s159
      %s161 = sphi 0, %s159
      %s162 = sphi 0, %s161
      %s176 = sphi 0, %s162
      %s180 = sphi 0, %s180
      %s182 = sphi 0, %s180
      %s183 = sphi 0, %s182
      %s197 = sphi 0, %s183
      %s205 = sphi 0, %s207
      %s208 = sphi 0, %s205
      %s209 = sphi 0, %s208
      %s225 = sphi 0, %s209
    $region4: #{tpu_custom_call.1} parent=1 // loop_header_branch
      %21 = sbr.rel (%p19) target = $region8
    $region5: #{tpu_custom_call.1} parent=1 // loop_body
      %s23 = ssub.s32 %s18, 1
      %s24 = ssub.s32 %s18, 2
      %s34 = sadd.s32 1, %s27
      %p35 = scmp.ge.s32.totalorder %s34, 1
      %s36 = scalar_select %p35, 0, %s34
      %s37 = sadd.s32 1, %s26
      %s38 = scalar_select %p35, %s37, %s26
      %p39 = scmp.ge.s32.totalorder %s38, 1
      %s40 = scalar_select %p39, 0, %s38
      %s41 = sadd.s32 1, %s25
      %s42 = scalar_select %p39, %s41, %s25
      %p43 = scmp.ge.s32.totalorder %s42, 2
      %s44 = scalar_select %p43, 0, %s42
      %s45 = sadd.s32 %s26, %s27
      %s46 = sadd.s32 %s40, %s36
      %s47 = ssub.s32 %s25, %s44
      %s48 = ssub.s32 %s45, %s46
      %s49 = sor.u32 %s47, %s48
      %p50 = scmp.eq.s32.totalorder %s49, 0
      %s52 = sadd.s32 %s51, 1
      %s53 = scalar_select %p50, %s51, %s52
      %p56 = pneg %p50
      %p57 = scmp.eq.s32.totalorder %s18, 1
      %p58 = por %p56, %p57
      %p59 = scmp.ne.s32.totalorder %s51, %s54
      %p60 = scmp.eq.s32.totalorder %s18, 0
      %p61 = por %p59, %p60
      %p62 = scmp.ne.s32.totalorder %s51, %s54
      %p63 = scmp.eq.s32.totalorder %s23, 1
      %p64 = por %p62, %p63
      %p65 = scmp.ne.s32.totalorder %s54, %s55
      %p66 = scmp.eq.s32.totalorder %s23, 0
      %p67 = por %p65, %p66
      %p68 = scmp.ne.s32.totalorder %s54, %s55
      %p69 = scmp.eq.s32.totalorder %s24, 1
      %p70 = por %p68, %p69
      %p72 = scmp.ne.s32.totalorder %s55, %s71
      %p73 = scmp.eq.s32.totalorder %s24, 0
      %p74 = por %p72, %p73
      %s76 = sadd.s32 %s75, 1
      %p79 = scmp.eq.s32.totalorder %s18, 1
      %p80 = scmp.ne.s32.totalorder %s75, %s77
      %p81 = scmp.eq.s32.totalorder %s18, 0
      %p82 = por %p80, %p81
      %p83 = scmp.ne.s32.totalorder %s75, %s77
      %p84 = scmp.eq.s32.totalorder %s23, 1
      %p85 = por %p83, %p84
      %p86 = scmp.ne.s32.totalorder %s77, %s78
      %p87 = scmp.eq.s32.totalorder %s23, 0
      %p88 = por %p86, %p87
      %p89 = scmp.ne.s32.totalorder %s77, %s78
      %p90 = scmp.eq.s32.totalorder %s24, 1
      %p91 = por %p89, %p90
      %p93 = scmp.ne.s32.totalorder %s78, %s92
      %p94 = scmp.eq.s32.totalorder %s24, 0
      %p95 = por %p93, %p94
      %s97 = sadd.s32 %s96, 1
      %p100 = scmp.eq.s32.totalorder %s18, 1
      %p101 = scmp.ne.s32.totalorder %s96, %s98
      %p102 = scmp.eq.s32.totalorder %s18, 0
      %p103 = por %p101, %p102
      %p104 = scmp.ne.s32.totalorder %s96, %s98
      %p105 = scmp.eq.s32.totalorder %s23, 1
      %p106 = por %p104, %p105
      %p107 = scmp.ne.s32.totalorder %s98, %s99
      %p108 = scmp.eq.s32.totalorder %s23, 0
      %p109 = por %p107, %p108
      %p110 = scmp.ne.s32.totalorder %s98, %s99
      %p111 = scmp.eq.s32.totalorder %s24, 1
      %p112 = por %p110, %p111
      %p114 = scmp.ne.s32.totalorder %s99, %s113
      %p115 = scmp.eq.s32.totalorder %s24, 0
      %p116 = por %p114, %p115
      %s118 = sadd.s32 %s117, 1
      %p121 = scmp.eq.s32.totalorder %s18, 1
      %p122 = scmp.ne.s32.totalorder %s117, %s119
      %p123 = scmp.eq.s32.totalorder %s18, 0
      %p124 = por %p122, %p123
      %p125 = scmp.ne.s32.totalorder %s117, %s119
      %p126 = scmp.eq.s32.totalorder %s23, 1
      %p127 = por %p125, %p126
      %p128 = scmp.ne.s32.totalorder %s119, %s120
      %p129 = scmp.eq.s32.totalorder %s23, 0
      %p130 = por %p128, %p129
      %p131 = scmp.ne.s32.totalorder %s119, %s120
      %p132 = scmp.eq.s32.totalorder %s24, 1
      %p133 = por %p131, %p132
      %p135 = scmp.ne.s32.totalorder %s120, %s134
      %p136 = scmp.eq.s32.totalorder %s24, 0
      %p137 = por %p135, %p136
      %s139 = sadd.s32 %s138, 1
      %p142 = scmp.eq.s32.totalorder %s18, 1
      %p143 = scmp.ne.s32.totalorder %s138, %s140
      %p144 = scmp.eq.s32.totalorder %s18, 0
      %p145 = por %p143, %p144
      %p146 = scmp.ne.s32.totalorder %s138, %s140
      %p147 = scmp.eq.s32.totalorder %s23, 1
      %p148 = por %p146, %p147
      %p149 = scmp.ne.s32.totalorder %s140, %s141
      %p150 = scmp.eq.s32.totalorder %s23, 0
      %p151 = por %p149, %p150
      %p152 = scmp.ne.s32.totalorder %s140, %s141
      %p153 = scmp.eq.s32.totalorder %s24, 1
      %p154 = por %p152, %p153
      %p156 = scmp.ne.s32.totalorder %s141, %s155
      %p157 = scmp.eq.s32.totalorder %s24, 0
      %p158 = por %p156, %p157
      %s160 = sadd.s32 %s159, 1
      %p163 = scmp.eq.s32.totalorder %s18, 1
      %p164 = scmp.ne.s32.totalorder %s159, %s161
      %p165 = scmp.eq.s32.totalorder %s18, 0
      %p166 = por %p164, %p165
      %p167 = scmp.ne.s32.totalorder %s159, %s161
      %p168 = scmp.eq.s32.totalorder %s23, 1
      %p169 = por %p167, %p168
      %p170 = scmp.ne.s32.totalorder %s161, %s162
      %p171 = scmp.eq.s32.totalorder %s23, 0
      %p172 = por %p170, %p171
      %p173 = scmp.ne.s32.totalorder %s161, %s162
      %p174 = scmp.eq.s32.totalorder %s24, 1
      %p175 = por %p173, %p174
      %p177 = scmp.ne.s32.totalorder %s162, %s176
      %p178 = scmp.eq.s32.totalorder %s24, 0
      %p179 = por %p177, %p178
      %s181 = sadd.s32 %s180, 1
      %p184 = scmp.eq.s32.totalorder %s18, 1
      %p185 = scmp.ne.s32.totalorder %s180, %s182
      %p186 = scmp.eq.s32.totalorder %s18, 0
      %p187 = por %p185, %p186
      %p188 = scmp.ne.s32.totalorder %s180, %s182
      %p189 = scmp.eq.s32.totalorder %s23, 1
      %p190 = por %p188, %p189
      %p191 = scmp.ne.s32.totalorder %s182, %s183
      %p192 = scmp.eq.s32.totalorder %s23, 0
      %p193 = por %p191, %p192
      %p194 = scmp.ne.s32.totalorder %s182, %s183
      %p195 = scmp.eq.s32.totalorder %s24, 1
      %p196 = por %p194, %p195
      %p198 = scmp.ne.s32.totalorder %s183, %s197
      %p199 = scmp.eq.s32.totalorder %s24, 0
      %p200 = por %p198, %p199
      %s201 = sadd.s32 %s25, %s26
      %s202 = sadd.s32 %s44, %s40
      %s203 = ssub.s32 %s201, %s202
      %p204 = scmp.eq.s32.totalorder %s203, 0
      %s206 = sadd.s32 %s205, 1
      %s207 = scalar_select %p204, %s205, %s206
      %p210 = pneg %p204
      %p211 = scmp.eq.s32.totalorder %s18, 1
      %p212 = por %p210, %p211
      %p213 = scmp.ne.s32.totalorder %s205, %s208
      %p214 = scmp.eq.s32.totalorder %s18, 0
      %p215 = por %p213, %p214
      %p216 = scmp.ne.s32.totalorder %s205, %s208
      %p217 = scmp.eq.s32.totalorder %s23, 1
      %p218 = por %p216, %p217
      %p219 = scmp.ne.s32.totalorder %s208, %s209
      %p220 = scmp.eq.s32.totalorder %s23, 0
      %p221 = por %p219, %p220
      %p222 = scmp.ne.s32.totalorder %s208, %s209
      %p223 = scmp.eq.s32.totalorder %s24, 1
      %p224 = por %p222, %p223
      %p226 = scmp.ne.s32.totalorder %s209, %s225
      %p227 = scmp.eq.s32.totalorder %s24, 0
      %p228 = por %p226, %p227
      %p229 = scmp.le.s32.totalorder 1, %s18
      %p230 = scmp.lt.s32.totalorder %s18, 3
      %p231 = pnand %p229, %p230
      %p232 = pneg %p231
      // Predicated region
      $region9: #{tpu_custom_call.1} parent=5 // pred_check
        _
      $region10: #{tpu_custom_call.1} parent=5 // pred_check_branch
        %234 = sbr.rel (%p231) target = $region12
      $region11: #{tpu_custom_call.1} parent=5 // pred_region
        %s235 = ssub.s32 %s18, 1
        // Predicated region
        $region13: #{tpu_custom_call.1} parent=11 // pred_check
          %p236 = pneg %p88
        $region14: #{tpu_custom_call.1} parent=11 // pred_check_branch
          %238 = sbr.rel (%p236) target = $region16
        $region15: #{tpu_custom_call.1} parent=11 // pred_region
          _
        $region16: #{tpu_custom_call.1} parent=11 // pred_fallthru
          _
        // Predicated region
        $region17: #{tpu_custom_call.1} parent=11 // pred_check
          %p239 = pneg %p109
        $region18: #{tpu_custom_call.1} parent=11 // pred_check_branch
          %241 = sbr.rel (%p239) target = $region20
        $region19: #{tpu_custom_call.1} parent=11 // pred_region
          _
        $region20: #{tpu_custom_call.1} parent=11 // pred_fallthru
          _
        // Predicated region
        $region21: #{tpu_custom_call.1} parent=11 // pred_check
          %p242 = pneg %p130
        $region22: #{tpu_custom_call.1} parent=11 // pred_check_branch
          %244 = sbr.rel (%p242) target = $region24
        $region23: #{tpu_custom_call.1} parent=11 // pred_region
          %246 = vsyncadd [#allocation3], 0
          %s247 = sshll.u32 %s3, 4
          %s248 = int_to_ptr.hbm [resolvable:$true] %s247
          %s249 = sshll.u32 [#allocation2], 4
          %s250 = int_to_ptr.vmem [resolvable:$true] %s249
          %255 = dma.hbm_to_vmem [thread:$0]  %s248, 512, %s250, [#allocation3], 64, 64, 4
        $region24: #{tpu_custom_call.1} parent=11 // pred_fallthru
          _
        // Predicated region
        $region25: #{tpu_custom_call.1} parent=11 // pred_check
          %p256 = pneg %p151
        $region26: #{tpu_custom_call.1} parent=11 // pred_check_branch
          %258 = sbr.rel (%p256) target = $region28
        $region27: #{tpu_custom_call.1} parent=11 // pred_region
          _
        $region28: #{tpu_custom_call.1} parent=11 // pred_fallthru
          _
        // Predicated region
        $region29: #{tpu_custom_call.1} parent=11 // pred_check
          %p259 = pneg %p172
        $region30: #{tpu_custom_call.1} parent=11 // pred_check_branch
          %261 = sbr.rel (%p259) target = $region32
        $region31: #{tpu_custom_call.1} parent=11 // pred_region
          %263 = vsyncadd [#allocation6], 0
          %s264 = sshll.u32 %s5, 4
          %s265 = int_to_ptr.hbm [resolvable:$true] %s264
          %s266 = sshll.u32 [#allocation5], 4
          %s267 = int_to_ptr.vmem [resolvable:$true] %s266
          %272 = dma.hbm_to_vmem [thread:$0]  %s265, 8192, %s267, [#allocation6], 512, 512, 32
        $region32: #{tpu_custom_call.1} parent=11 // pred_fallthru
          _
        // Predicated region
        $region33: #{tpu_custom_call.1} parent=11 // pred_check
          %p273 = pneg %p193
        $region34: #{tpu_custom_call.1} parent=11 // pred_check_branch
          %275 = sbr.rel (%p273) target = $region36
        $region35: #{tpu_custom_call.1} parent=11 // pred_region
          _
        $region36: #{tpu_custom_call.1} parent=11 // pred_fallthru
          _
      $region12: #{tpu_custom_call.1} parent=5 // pred_fallthru
        _
      %p276 = scmp.lt.s32.totalorder %s18, 2
      // Predicated region
      $region37: #{tpu_custom_call.1} parent=5 // pred_check
        %p277 = pneg %p276
      $region38: #{tpu_custom_call.1} parent=5 // pred_check_branch
        %279 = sbr.rel (%p277) target = $region40
      $region39: #{tpu_custom_call.1} parent=5 // pred_region
        // Predicated region
        $region41: #{tpu_custom_call.1} parent=39 // pred_check
          %p280 = pneg %p61
        $region42: #{tpu_custom_call.1} parent=39 // pred_check_branch
          %282 = sbr.rel (%p280) target = $region44
        $region43: #{tpu_custom_call.1} parent=39 // pred_region
          %s283 = sadd.s32 %s26, %s27
          %p284 = scmp.lt.s32.totalorder %s25, 1
          %s285 = scalar_select %p284, %s25, 1
          %p286 = scmp.lt.s32.totalorder %s283, 0
          %s287 = scalar_select %p286, %s283, 0
          %s288 = sadd.s32 %s287, %s285
          %s289 = smul.addr %s288, 4
          %s290 = scalar_lea.vmem %s0, %s289
          %s291 = sadd.s32 %s26, %s27
        $region44: #{tpu_custom_call.1} parent=39 // pred_fallthru
          _
      $region40: #{tpu_custom_call.1} parent=5 // pred_fallthru
        _
      %p292 = scmp.le.s32.totalorder 1, %s18
      %p293 = scmp.lt.s32.totalorder %s18, 3
      %p294 = pnand %p292, %p293
      %p295 = pneg %p294
      // Predicated region
      $region45: #{tpu_custom_call.1} parent=5 // pred_check
        _
      $region46: #{tpu_custom_call.1} parent=5 // pred_check_branch
        %297 = sbr.rel (%p294) target = $region48
      $region47: #{tpu_custom_call.1} parent=5 // pred_region
        %s298 = ssub.s32 %s18, 1
        // Predicated region
        $region49: #{tpu_custom_call.1} parent=47 // pred_check
          %p299 = pneg %p130
        $region50: #{tpu_custom_call.1} parent=47 // pred_check_branch
          %301 = sbr.rel (%p299) target = $region52
        $region51: #{tpu_custom_call.1} parent=47 // pred_region
          %303 = dma.done [#allocation3], 512
        $region52: #{tpu_custom_call.1} parent=47 // pred_fallthru
          _
        // Predicated region
        $region53: #{tpu_custom_call.1} parent=47 // pred_check
          %p304 = pneg %p172
        $region54: #{tpu_custom_call.1} parent=47 // pred_check_branch
          %306 = sbr.rel (%p304) target = $region56
        $region55: #{tpu_custom_call.1} parent=47 // pred_region
          %308 = dma.done [#allocation6], 8192
        $region56: #{tpu_custom_call.1} parent=47 // pred_fallthru
          _
        %s309 = sadd.s32 %s29, %s30
        %p310 = scmp.lt.s32.totalorder %s28, 1
        %s311 = scalar_select %p310, %s28, 1
        %p312 = scmp.lt.s32.totalorder %s309, 0
        %s313 = scalar_select %p312, %s309, 0
        %s314 = sadd.s32 %s313, %s311
        %s315 = smul.addr %s314, 4
        %s316 = scalar_lea.vmem %s0, %s315
        %p317 = pneg %p67
        %p318 = pneg %p64
        %p319 = pneg %p88
        %p320 = pneg %p85
        %p321 = pneg %p109
        %p322 = pneg %p106
        %p323 = pneg %p130
        %p324 = pneg %p127
        %p325 = pneg %p151
        %p326 = pneg %p148
        %p327 = pneg %p172
        %p328 = pneg %p169
        %p329 = pneg %p193
        %p330 = pneg %p190
        %p331 = pneg %p221
        %p332 = pneg %p218
        %s333 = sand.u32 %s208, 1
        %s334 = scalar_lea.sflag [#allocation4], %s333
        %s335 = sand.u32 %s208, 1
        %s336 = smul.addr %s335, 8
        %s337 = scalar_lea.vmem [#allocation7], %s336
        %s338 = sadd.s32 %s29, %s30
        %p339 = scmp.lt.s32.totalorder %s28, 1
        %s340 = scalar_select %p339, %s28, 1
        %p341 = scmp.lt.s32.totalorder %s338, 0
        %s342 = scalar_select %p341, %s338, 0
        %s343 = sadd.s32 %s342, %s340
        %s344 = smul.addr %s343, 4
        %s345 = scalar_lea.vmem %s0, %s344
        %s346 = sadd.s32 %s29, %s30
        %s347 = sadd.s32 %s28, %s29
        %p349 = scmp.eq.s32.totalorder %s30, 0
        // Predicated region
        $region57: #{tpu_custom_call.1} parent=47 // pred_check
          %p350 = pneg %p349
        $region58: #{tpu_custom_call.1} parent=47 // pred_check_branch
          %352 = sbr.rel (%p350) target = $region60
        $region59: #{tpu_custom_call.1} parent=47 // pred_region
          %353 = vst [vmem:[%s337] sm:$0xff] -inf
        $region60: #{tpu_custom_call.1} parent=47 // pred_fallthru
          _
        %v354 = vld [vmem:[%s345] sm:$0x7]
        %v355 = vld [vmem:[%s1] sm:$0x3]
        %v356 = vunpack.c.l.bf16 %v355
        %v357 = vld [vmem:[%s2] sm:$0x1]
        %v359 = vperm.slane %v357, 0
        %361 = vxpose.xlu0.b32.start [1/16] %v354, 128
        %362 = vxpose.xlu0.b32.cont [2/16] 0.0, 128
        %363 = vxpose.xlu0.b32.cont [3/16] 0.0, 128
        %364 = vxpose.xlu0.b32.cont [4/16] 0.0, 128
        %365 = vxpose.xlu0.b32.cont [5/16] 0.0, 128
        %366 = vxpose.xlu0.b32.cont [6/16] 0.0, 128
        %367 = vxpose.xlu0.b32.cont [7/16] 0.0, 128
        %368 = vxpose.xlu0.b32.cont [8/16] 0.0, 128
        %369 = vxpose.xlu0.b32.cont [9/16] 0.0, 128
        %370 = vxpose.xlu0.b32.cont [10/16] 0.0, 128
        %371 = vxpose.xlu0.b32.cont [11/16] 0.0, 128
        %372 = vxpose.xlu0.b32.cont [12/16] 0.0, 128
        %373 = vxpose.xlu0.b32.cont [13/16] 0.0, 128
        %374 = vxpose.xlu0.b32.cont [14/16] 0.0, 128
        %375 = vxpose.xlu0.b32.cont [15/16] 0.0, 128
        %376 = vxpose.xlu0.b32.end [16/16] 0.0, 128
        %v377 = vpop.trf.xlu0
        %v378 = vpop.trf.xlu0
        %v379 = vpop.trf.xlu0
        %v380 = vpop.trf.xlu0
        %v381 = vpop.trf.xlu0
        %v382 = vpop.trf.xlu0
        %v383 = vpop.trf.xlu0
        %v384 = vpop.trf.xlu0
        %v385 = vpop.trf.xlu0
        %v386 = vpop.trf.xlu0
        %v387 = vpop.trf.xlu0
        %v388 = vpop.trf.xlu0
        %v389 = vpop.trf.xlu0
        %v390 = vpop.trf.xlu0
        %v391 = vpop.trf.xlu0
        %v392 = vpop.trf.xlu0
        %vm393 = vcmask 23552
        %v395 = vsel %vm393, %v377, 0
        %v398 = vsel %vm393, %v378, 0
        %vm400 = vcmask 1042432
        %v402 = vsel %vm400, %v356, 0
        %404 = vmatpush.msra.mxu0 0.0
        %405 = vmatpush.msra.mxu0 0.0
        %406 = vmatpush.msra.mxu0 0.0
        %407 = vmatpush.msra.mxu0 0.0
        %408 = vmatpush.msra.mxu0 0.0
        %409 = vmatpush.msra.mxu0 0.0
        %410 = vmatpush.msra.mxu0 0.0
        %411 = vmatpush.msra.mxu0 0.0
        %412 = vmatpush.msra.mxu0 0.0
        %413 = vmatpush.msra.mxu0 0.0
        %414 = vmatpush.msra.mxu0 0.0
        %415 = vmatpush.msra.mxu0 0.0
        %416 = vmatpush.msra.mxu0 0.0
        %417 = vmatpush.msra.mxu0 0.0
        %418 = vmatpush.msra.mxu0 0.0
        %419 = vmatpush.msra.mxu0 %v402
        %420 = vmatmul.f32.gmra.mxu0 %v395
        %v421 = vpop.f32.mrf.mxu0
        %v422 = vadd.f32 %v359, %v421
        %423 = vmatmul.f32.gmra.mxu0 %v398
        %v424 = vpop.f32.mrf.mxu0
        %v425 = vadd.f32 %v359, %v424
        %426 = vdwg.mxu0
        %v427 = vmax.f32 %v422, 0.0
        %v428 = vmax.f32 %v425, 0.0
        %v429 = vld [vmem:[#allocation2] sm:$0xf]
        %v430 = vld [vmem:[#allocation2 + $0x4] sm:$0xf]
        %v431 = vld [vmem:[#allocation2 + $0x8] sm:$0xf]
        %v432 = vld [vmem:[#allocation2 + $0xc] sm:$0xf]
        %v433 = vld [vmem:[#allocation2 + $0x10] sm:$0xf]
        %v434 = vld [vmem:[#allocation2 + $0x14] sm:$0xf]
        %v435 = vld [vmem:[#allocation2 + $0x18] sm:$0xf]
        %v436 = vld [vmem:[#allocation2 + $0x1c] sm:$0xf]
        %v437 = vpack.c.bf16 %v428, %v427
        %v438 = vld [vmem:[%s4] sm:$0x1]
        %v440 = vperm.slane %v438, 0
        %v450 = vunpack.c.l.b16 %v429
        %v451 = vunpack.c.l.b16 %v430
        %v452 = vunpack.c.l.b16 %v431
        %v453 = vunpack.c.l.b16 %v432
        %v454 = vunpack.c.l.b16 %v433
        %v455 = vunpack.c.l.b16 %v434
        %v456 = vunpack.c.l.b16 %v435
        %v457 = vunpack.c.l.b16 %v436
        %v458 = vpack.c.b16 %v451, %v450
        %v459 = vpack.c.b16 %v453, %v452
        %v460 = vpack.c.b16 %v455, %v454
        %v461 = vpack.c.b16 %v457, %v456
        %vm466 = vcmask 523264
        %v468 = vsel %vm466, %v437, 0
        %470 = vmatpush.bf16.msra.mxu0 0
        %471 = vmatpush.bf16.msra.mxu0 0
        %472 = vmatpush.bf16.msra.mxu0 0
        %473 = vmatpush.bf16.msra.mxu0 0
        %474 = vmatpush.bf16.msra.mxu0 %v461
        %475 = vmatpush.bf16.msra.mxu0 %v460
        %476 = vmatpush.bf16.msra.mxu0 %v459
        %477 = vmatpush.bf16.msra.mxu0 %v458
        %478 = vmatmul.bf16.gmra.mxu0 %v468
        %v479 = vpop.f32.mrf.mxu0
        %v480 = vadd.f32 %v440, %v479
        %v481 = vpop.f32.mrf.mxu0
        %v482 = vadd.f32 %v440, %v481
        %483 = vdwg.mxu0
        %v484 = vmax.f32 %v480, 0.0
        %v485 = vmax.f32 %v482, 0.0
        %v486 = vld [vmem:[#allocation5] sm:$0xff]
        %v487 = vld [vmem:[#allocation5 + $0x8] sm:$0xff]
        %v488 = vld [vmem:[#allocation5 + $0x10] sm:$0xff]
        %v489 = vld [vmem:[#allocation5 + $0x18] sm:$0xff]
        %v490 = vld [vmem:[#allocation5 + $0x20] sm:$0xff]
        %v491 = vld [vmem:[#allocation5 + $0x28] sm:$0xff]
        %v492 = vld [vmem:[#allocation5 + $0x30] sm:$0xff]
        %v493 = vld [vmem:[#allocation5 + $0x38] sm:$0xff]
        %v494 = vld [vmem:[#allocation5 + $0x40] sm:$0xff]
        %v495 = vld [vmem:[#allocation5 + $0x48] sm:$0xff]
        %v496 = vld [vmem:[#allocation5 + $0x50] sm:$0xff]
        %v497 = vld [vmem:[#allocation5 + $0x58] sm:$0xff]
        %v498 = vld [vmem:[#allocation5 + $0x60] sm:$0xff]
        %v499 = vld [vmem:[#allocation5 + $0x68] sm:$0xff]
        %v500 = vld [vmem:[#allocation5 + $0x70] sm:$0xff]
        %v501 = vld [vmem:[#allocation5 + $0x78] sm:$0xff]
        %v502 = vld [vmem:[#allocation5 + $0x80] sm:$0xff]
        %v503 = vld [vmem:[#allocation5 + $0x88] sm:$0xff]
        %v504 = vld [vmem:[#allocation5 + $0x90] sm:$0xff]
        %v505 = vld [vmem:[#allocation5 + $0x98] sm:$0xff]
        %v506 = vld [vmem:[#allocation5 + $0xa0] sm:$0xff]
        %v507 = vld [vmem:[#allocation5 + $0xa8] sm:$0xff]
        %v508 = vld [vmem:[#allocation5 + $0xb0] sm:$0xff]
        %v509 = vld [vmem:[#allocation5 + $0xb8] sm:$0xff]
        %v510 = vld [vmem:[#allocation5 + $0xc0] sm:$0xff]
        %v511 = vld [vmem:[#allocation5 + $0xc8] sm:$0xff]
        %v512 = vld [vmem:[#allocation5 + $0xd0] sm:$0xff]
        %v513 = vld [vmem:[#allocation5 + $0xd8] sm:$0xff]
        %v514 = vld [vmem:[#allocation5 + $0xe0] sm:$0xff]
        %v515 = vld [vmem:[#allocation5 + $0xe8] sm:$0xff]
        %v516 = vld [vmem:[#allocation5 + $0xf0] sm:$0xff]
        %v517 = vld [vmem:[#allocation5 + $0xf8] sm:$0xff]
        %v518 = vld [vmem:[#allocation5 + $0x100] sm:$0xff]
        %v519 = vld [vmem:[#allocation5 + $0x108] sm:$0xff]
        %v520 = vld [vmem:[#allocation5 + $0x110] sm:$0xff]
        %v521 = vld [vmem:[#allocation5 + $0x118] sm:$0xff]
        %v522 = vld [vmem:[#allocation5 + $0x120] sm:$0xff]
        %v523 = vld [vmem:[#allocation5 + $0x128] sm:$0xff]
        %v524 = vld [vmem:[#allocation5 + $0x130] sm:$0xff]
        %v525 = vld [vmem:[#allocation5 + $0x138] sm:$0xff]
        %v526 = vld [vmem:[#allocation5 + $0x140] sm:$0xff]
        %v527 = vld [vmem:[#allocation5 + $0x148] sm:$0xff]
        %v528 = vld [vmem:[#allocation5 + $0x150] sm:$0xff]
        %v529 = vld [vmem:[#allocation5 + $0x158] sm:$0xff]
        %v530 = vld [vmem:[#allocation5 + $0x160] sm:$0xff]
        %v531 = vld [vmem:[#allocation5 + $0x168] sm:$0xff]
        %v532 = vld [vmem:[#allocation5 + $0x170] sm:$0xff]
        %v533 = vld [vmem:[#allocation5 + $0x178] sm:$0xff]
        %v534 = vld [vmem:[#allocation5 + $0x180] sm:$0xff]
        %v535 = vld [vmem:[#allocation5 + $0x188] sm:$0xff]
        %v536 = vld [vmem:[#allocation5 + $0x190] sm:$0xff]
        %v537 = vld [vmem:[#allocation5 + $0x198] sm:$0xff]
        %v538 = vld [vmem:[#allocation5 + $0x1a0] sm:$0xff]
        %v539 = vld [vmem:[#allocation5 + $0x1a8] sm:$0xff]
        %v540 = vld [vmem:[#allocation5 + $0x1b0] sm:$0xff]
        %v541 = vld [vmem:[#allocation5 + $0x1b8] sm:$0xff]
        %v542 = vld [vmem:[#allocation5 + $0x1c0] sm:$0xff]
        %v543 = vld [vmem:[#allocation5 + $0x1c8] sm:$0xff]
        %v544 = vld [vmem:[#allocation5 + $0x1d0] sm:$0xff]
        %v545 = vld [vmem:[#allocation5 + $0x1d8] sm:$0xff]
        %v546 = vld [vmem:[#allocation5 + $0x1e0] sm:$0xff]
        %v547 = vld [vmem:[#allocation5 + $0x1e8] sm:$0xff]
        %v548 = vld [vmem:[#allocation5 + $0x1f0] sm:$0xff]
        %v549 = vld [vmem:[#allocation5 + $0x1f8] sm:$0xff]
        %v550 = vpack.c.bf16 %v485, %v484
        %v551 = vld [vmem:[%s6] sm:$0xff]
        %v553 = vperm.slane %v551, 0
        %v554 = vperm.slane %v551, 1
        %v555 = vperm.slane %v551, 2
        %v556 = vperm.slane %v551, 3
        %v557 = vperm.slane %v551, 4
        %v558 = vperm.slane %v551, 5
        %v559 = vperm.slane %v551, 6
        %v560 = vperm.slane %v551, 7
        %v633 = vunpack.c.l.b16 %v486
        %v634 = vunpack.c.h.b16 %v486
        %v635 = vunpack.c.l.b16 %v487
        %v636 = vunpack.c.h.b16 %v487
        %v637 = vunpack.c.l.b16 %v488
        %v638 = vunpack.c.h.b16 %v488
        %v639 = vunpack.c.l.b16 %v489
        %v640 = vunpack.c.h.b16 %v489
        %v641 = vunpack.c.l.b16 %v490
        %v642 = vunpack.c.h.b16 %v490
        %v643 = vunpack.c.l.b16 %v491
        %v644 = vunpack.c.h.b16 %v491
        %v645 = vunpack.c.l.b16 %v492
        %v646 = vunpack.c.h.b16 %v492
        %v647 = vunpack.c.l.b16 %v493
        %v648 = vunpack.c.h.b16 %v493
        %v649 = vunpack.c.l.b16 %v494
        %v650 = vunpack.c.h.b16 %v494
        %v651 = vunpack.c.l.b16 %v495
        %v652 = vunpack.c.h.b16 %v495
        %v653 = vunpack.c.l.b16 %v496
        %v654 = vunpack.c.h.b16 %v496
        %v655 = vunpack.c.l.b16 %v497
        %v656 = vunpack.c.h.b16 %v497
        %v657 = vunpack.c.l.b16 %v498
        %v658 = vunpack.c.h.b16 %v498
        %v659 = vunpack.c.l.b16 %v499
        %v660 = vunpack.c.h.b16 %v499
        %v661 = vunpack.c.l.b16 %v500
        %v662 = vunpack.c.h.b16 %v500
        %v663 = vunpack.c.l.b16 %v501
        %v664 = vunpack.c.h.b16 %v501
        %v665 = vunpack.c.l.b16 %v502
        %v666 = vunpack.c.h.b16 %v502
        %v667 = vunpack.c.l.b16 %v503
        %v668 = vunpack.c.h.b16 %v503
        %v669 = vunpack.c.l.b16 %v504
        %v670 = vunpack.c.h.b16 %v504
        %v671 = vunpack.c.l.b16 %v505
        %v672 = vunpack.c.h.b16 %v505
        %v673 = vunpack.c.l.b16 %v506
        %v674 = vunpack.c.h.b16 %v506
        %v675 = vunpack.c.l.b16 %v507
        %v676 = vunpack.c.h.b16 %v507
        %v677 = vunpack.c.l.b16 %v508
        %v678 = vunpack.c.h.b16 %v508
        %v679 = vunpack.c.l.b16 %v509
        %v680 = vunpack.c.h.b16 %v509
        %v681 = vunpack.c.l.b16 %v510
        %v682 = vunpack.c.h.b16 %v510
        %v683 = vunpack.c.l.b16 %v511
        %v684 = vunpack.c.h.b16 %v511
        %v685 = vunpack.c.l.b16 %v512
        %v686 = vunpack.c.h.b16 %v512
        %v687 = vunpack.c.l.b16 %v513
        %v688 = vunpack.c.h.b16 %v513
        %v689 = vunpack.c.l.b16 %v514
        %v690 = vunpack.c.h.b16 %v514
        %v691 = vunpack.c.l.b16 %v515
        %v692 = vunpack.c.h.b16 %v515
        %v693 = vunpack.c.l.b16 %v516
        %v694 = vunpack.c.h.b16 %v516
        %v695 = vunpack.c.l.b16 %v517
        %v696 = vunpack.c.h.b16 %v517
        %v697 = vunpack.c.l.b16 %v518
        %v698 = vunpack.c.h.b16 %v518
        %v699 = vunpack.c.l.b16 %v519
        %v700 = vunpack.c.h.b16 %v519
        %v701 = vunpack.c.l.b16 %v520
        %v702 = vunpack.c.h.b16 %v520
        %v703 = vunpack.c.l.b16 %v521
        %v704 = vunpack.c.h.b16 %v521
        %v705 = vunpack.c.l.b16 %v522
        %v706 = vunpack.c.h.b16 %v522
        %v707 = vunpack.c.l.b16 %v523
        %v708 = vunpack.c.h.b16 %v523
        %v709 = vunpack.c.l.b16 %v524
        %v710 = vunpack.c.h.b16 %v524
        %v711 = vunpack.c.l.b16 %v525
        %v712 = vunpack.c.h.b16 %v525
        %v713 = vunpack.c.l.b16 %v526
        %v714 = vunpack.c.h.b16 %v526
        %v715 = vunpack.c.l.b16 %v527
        %v716 = vunpack.c.h.b16 %v527
        %v717 = vunpack.c.l.b16 %v528
        %v718 = vunpack.c.h.b16 %v528
        %v719 = vunpack.c.l.b16 %v529
        %v720 = vunpack.c.h.b16 %v529
        %v721 = vunpack.c.l.b16 %v530
        %v722 = vunpack.c.h.b16 %v530
        %v723 = vunpack.c.l.b16 %v531
        %v724 = vunpack.c.h.b16 %v531
        %v725 = vunpack.c.l.b16 %v532
        %v726 = vunpack.c.h.b16 %v532
        %v727 = vunpack.c.l.b16 %v533
        %v728 = vunpack.c.h.b16 %v533
        %v729 = vunpack.c.l.b16 %v534
        %v730 = vunpack.c.h.b16 %v534
        %v731 = vunpack.c.l.b16 %v535
        %v732 = vunpack.c.h.b16 %v535
        %v733 = vunpack.c.l.b16 %v536
        %v734 = vunpack.c.h.b16 %v536
        %v735 = vunpack.c.l.b16 %v537
        %v736 = vunpack.c.h.b16 %v537
        %v737 = vunpack.c.l.b16 %v538
        %v738 = vunpack.c.h.b16 %v538
        %v739 = vunpack.c.l.b16 %v539
        %v740 = vunpack.c.h.b16 %v539
        %v741 = vunpack.c.l.b16 %v540
        %v742 = vunpack.c.h.b16 %v540
        %v743 = vunpack.c.l.b16 %v541
        %v744 = vunpack.c.h.b16 %v541
        %v745 = vunpack.c.l.b16 %v542
        %v746 = vunpack.c.h.b16 %v542
        %v747 = vunpack.c.l.b16 %v543
        %v748 = vunpack.c.h.b16 %v543
        %v749 = vunpack.c.l.b16 %v544
        %v750 = vunpack.c.h.b16 %v544
        %v751 = vunpack.c.l.b16 %v545
        %v752 = vunpack.c.h.b16 %v545
        %v753 = vunpack.c.l.b16 %v546
        %v754 = vunpack.c.h.b16 %v546
        %v755 = vunpack.c.l.b16 %v547
        %v756 = vunpack.c.h.b16 %v547
        %v757 = vunpack.c.l.b16 %v548
        %v758 = vunpack.c.h.b16 %v548
        %v759 = vunpack.c.l.b16 %v549
        %v760 = vunpack.c.h.b16 %v549
        %v761 = vpack.c.b16 %v641, %v633
        %v762 = vpack.c.b16 %v642, %v634
        %v763 = vpack.c.b16 %v643, %v635
        %v764 = vpack.c.b16 %v644, %v636
        %v765 = vpack.c.b16 %v645, %v637
        %v766 = vpack.c.b16 %v646, %v638
        %v767 = vpack.c.b16 %v647, %v639
        %v768 = vpack.c.b16 %v648, %v640
        %v769 = vpack.c.b16 %v657, %v649
        %v770 = vpack.c.b16 %v658, %v650
        %v771 = vpack.c.b16 %v659, %v651
        %v772 = vpack.c.b16 %v660, %v652
        %v773 = vpack.c.b16 %v661, %v653
        %v774 = vpack.c.b16 %v662, %v654
        %v775 = vpack.c.b16 %v663, %v655
        %v776 = vpack.c.b16 %v664, %v656
        %v777 = vpack.c.b16 %v673, %v665
        %v778 = vpack.c.b16 %v674, %v666
        %v779 = vpack.c.b16 %v675, %v667
        %v780 = vpack.c.b16 %v676, %v668
        %v781 = vpack.c.b16 %v677, %v669
        %v782 = vpack.c.b16 %v678, %v670
        %v783 = vpack.c.b16 %v679, %v671
        %v784 = vpack.c.b16 %v680, %v672
        %v785 = vpack.c.b16 %v689, %v681
        %v786 = vpack.c.b16 %v690, %v682
        %v787 = vpack.c.b16 %v691, %v683
        %v788 = vpack.c.b16 %v692, %v684
        %v789 = vpack.c.b16 %v693, %v685
        %v790 = vpack.c.b16 %v694, %v686
        %v791 = vpack.c.b16 %v695, %v687
        %v792 = vpack.c.b16 %v696, %v688
        %v793 = vpack.c.b16 %v705, %v697
        %v794 = vpack.c.b16 %v706, %v698
        %v795 = vpack.c.b16 %v707, %v699
        %v796 = vpack.c.b16 %v708, %v700
        %v797 = vpack.c.b16 %v709, %v701
        %v798 = vpack.c.b16 %v710, %v702
        %v799 = vpack.c.b16 %v711, %v703
        %v800 = vpack.c.b16 %v712, %v704
        %v801 = vpack.c.b16 %v721, %v713
        %v802 = vpack.c.b16 %v722, %v714
        %v803 = vpack.c.b16 %v723, %v715
        %v804 = vpack.c.b16 %v724, %v716
        %v805 = vpack.c.b16 %v725, %v717
        %v806 = vpack.c.b16 %v726, %v718
        %v807 = vpack.c.b16 %v727, %v719
        %v808 = vpack.c.b16 %v728, %v720
        %v809 = vpack.c.b16 %v737, %v729
        %v810 = vpack.c.b16 %v738, %v730
        %v811 = vpack.c.b16 %v739, %v731
        %v812 = vpack.c.b16 %v740, %v732
        %v813 = vpack.c.b16 %v741, %v733
        %v814 = vpack.c.b16 %v742, %v734
        %v815 = vpack.c.b16 %v743, %v735
        %v816 = vpack.c.b16 %v744, %v736
        %v817 = vpack.c.b16 %v753, %v745
        %v818 = vpack.c.b16 %v754, %v746
        %v819 = vpack.c.b16 %v755, %v747
        %v820 = vpack.c.b16 %v756, %v748
        %v821 = vpack.c.b16 %v757, %v749
        %v822 = vpack.c.b16 %v758, %v750
        %v823 = vpack.c.b16 %v759, %v751
        %v824 = vpack.c.b16 %v760, %v752
        %889 = vmatpush.bf16.msra.mxu0 %v817
        %890 = vmatpush.bf16.msra.mxu0 %v809
        %891 = vmatpush.bf16.msra.mxu0 %v801
        %892 = vmatpush.bf16.msra.mxu0 %v793
        %893 = vmatpush.bf16.msra.mxu0 %v785
        %894 = vmatpush.bf16.msra.mxu0 %v777
        %895 = vmatpush.bf16.msra.mxu0 %v769
        %896 = vmatpush.bf16.msra.mxu0 %v761
        %897 = vmatmul.bf16.gmra.mxu0 %v550
        %v898 = vpop.f32.mrf.mxu0
        %v899 = vadd.f32 %v553, %v898
        %v900 = vpop.f32.mrf.mxu0
        %v901 = vadd.f32 %v553, %v900
        %902 = vdwg.mxu0
        %903 = vmatpush.bf16.msra.mxu0 %v818
        %904 = vmatpush.bf16.msra.mxu0 %v810
        %905 = vmatpush.bf16.msra.mxu0 %v802
        %906 = vmatpush.bf16.msra.mxu0 %v794
        %907 = vmatpush.bf16.msra.mxu0 %v786
        %908 = vmatpush.bf16.msra.mxu0 %v778
        %909 = vmatpush.bf16.msra.mxu0 %v770
        %910 = vmatpush.bf16.msra.mxu0 %v762
        %911 = vmatmul.bf16.gmra.mxu0 %v550
        %v912 = vpop.f32.mrf.mxu0
        %v913 = vadd.f32 %v554, %v912
        %v914 = vpop.f32.mrf.mxu0
        %v915 = vadd.f32 %v554, %v914
        %916 = vdwg.mxu0
        %917 = vmatpush.bf16.msra.mxu0 %v819
        %918 = vmatpush.bf16.msra.mxu0 %v811
        %919 = vmatpush.bf16.msra.mxu0 %v803
        %920 = vmatpush.bf16.msra.mxu0 %v795
        %921 = vmatpush.bf16.msra.mxu0 %v787
        %922 = vmatpush.bf16.msra.mxu0 %v779
        %923 = vmatpush.bf16.msra.mxu0 %v771
        %924 = vmatpush.bf16.msra.mxu0 %v763
        %925 = vmatmul.bf16.gmra.mxu0 %v550
        %v926 = vpop.f32.mrf.mxu0
        %v927 = vadd.f32 %v555, %v926
        %v928 = vpop.f32.mrf.mxu0
        %v929 = vadd.f32 %v555, %v928
        %930 = vdwg.mxu0
        %931 = vmatpush.bf16.msra.mxu0 %v820
        %932 = vmatpush.bf16.msra.mxu0 %v812
        %933 = vmatpush.bf16.msra.mxu0 %v804
        %934 = vmatpush.bf16.msra.mxu0 %v796
        %935 = vmatpush.bf16.msra.mxu0 %v788
        %936 = vmatpush.bf16.msra.mxu0 %v780
        %937 = vmatpush.bf16.msra.mxu0 %v772
        %938 = vmatpush.bf16.msra.mxu0 %v764
        %939 = vmatmul.bf16.gmra.mxu0 %v550
        %v940 = vpop.f32.mrf.mxu0
        %v941 = vadd.f32 %v556, %v940
        %v942 = vpop.f32.mrf.mxu0
        %v943 = vadd.f32 %v556, %v942
        %944 = vdwg.mxu0
        %945 = vmatpush.bf16.msra.mxu0 %v821
        %946 = vmatpush.bf16.msra.mxu0 %v813
        %947 = vmatpush.bf16.msra.mxu0 %v805
        %948 = vmatpush.bf16.msra.mxu0 %v797
        %949 = vmatpush.bf16.msra.mxu0 %v789
        %950 = vmatpush.bf16.msra.mxu0 %v781
        %951 = vmatpush.bf16.msra.mxu0 %v773
        %952 = vmatpush.bf16.msra.mxu0 %v765
        %953 = vmatmul.bf16.gmra.mxu0 %v550
        %v954 = vpop.f32.mrf.mxu0
        %v955 = vadd.f32 %v557, %v954
        %v956 = vpop.f32.mrf.mxu0
        %v957 = vadd.f32 %v557, %v956
        %958 = vdwg.mxu0
        %959 = vmatpush.bf16.msra.mxu0 %v822
        %960 = vmatpush.bf16.msra.mxu0 %v814
        %961 = vmatpush.bf16.msra.mxu0 %v806
        %962 = vmatpush.bf16.msra.mxu0 %v798
        %963 = vmatpush.bf16.msra.mxu0 %v790
        %964 = vmatpush.bf16.msra.mxu0 %v782
        %965 = vmatpush.bf16.msra.mxu0 %v774
        %966 = vmatpush.bf16.msra.mxu0 %v766
        %967 = vmatmul.bf16.gmra.mxu0 %v550
        %v968 = vpop.f32.mrf.mxu0
        %v969 = vadd.f32 %v558, %v968
        %v970 = vpop.f32.mrf.mxu0
        %v971 = vadd.f32 %v558, %v970
        %972 = vdwg.mxu0
        %973 = vmatpush.bf16.msra.mxu0 %v823
        %974 = vmatpush.bf16.msra.mxu0 %v815
        %975 = vmatpush.bf16.msra.mxu0 %v807
        %976 = vmatpush.bf16.msra.mxu0 %v799
        %977 = vmatpush.bf16.msra.mxu0 %v791
        %978 = vmatpush.bf16.msra.mxu0 %v783
        %979 = vmatpush.bf16.msra.mxu0 %v775
        %980 = vmatpush.bf16.msra.mxu0 %v767
        %981 = vmatmul.bf16.gmra.mxu0 %v550
        %v982 = vpop.f32.mrf.mxu0
        %v983 = vadd.f32 %v559, %v982
        %v984 = vpop.f32.mrf.mxu0
        %v985 = vadd.f32 %v559, %v984
        %986 = vdwg.mxu0
        %987 = vmatpush.bf16.msra.mxu0 %v824
        %988 = vmatpush.bf16.msra.mxu0 %v816
        %989 = vmatpush.bf16.msra.mxu0 %v808
        %990 = vmatpush.bf16.msra.mxu0 %v800
        %991 = vmatpush.bf16.msra.mxu0 %v792
        %992 = vmatpush.bf16.msra.mxu0 %v784
        %993 = vmatpush.bf16.msra.mxu0 %v776
        %994 = vmatpush.bf16.msra.mxu0 %v768
        %995 = vmatmul.bf16.gmra.mxu0 %v550
        %v996 = vpop.f32.mrf.mxu0
        %v997 = vadd.f32 %v560, %v996
        %v998 = vpop.f32.mrf.mxu0
        %v999 = vadd.f32 %v560, %v998
        %1000 = vdwg.mxu0
        %v1001 = vmax.f32 %v899, 0.0
        %v1002 = vmax.f32 %v913, 0.0
        %v1003 = vmax.f32 %v927, 0.0
        %v1004 = vmax.f32 %v941, 0.0
        %v1005 = vmax.f32 %v955, 0.0
        %v1006 = vmax.f32 %v969, 0.0
        %v1007 = vmax.f32 %v983, 0.0
        %v1008 = vmax.f32 %v997, 0.0
        %v1009 = vmax.f32 %v901, 0.0
        %v1010 = vmax.f32 %v915, 0.0
        %v1011 = vmax.f32 %v929, 0.0
        %v1012 = vmax.f32 %v943, 0.0
        %v1013 = vmax.f32 %v957, 0.0
        %v1014 = vmax.f32 %v971, 0.0
        %v1015 = vmax.f32 %v985, 0.0
        %v1016 = vmax.f32 %v999, 0.0
        %v1017 = vmax.f32 %v1001, %v1009
        %v1018 = vrot.slane %v1017, 4
        %v1019 = vmax.f32 %v1017, %v1018
        %v1020 = vrot.slane %v1019, 2
        %v1021 = vmax.f32 %v1019, %v1020
        %v1022 = vrot.slane %v1021, 1
        %v1023 = vmax.f32 %v1021, %v1022
        %v1024 = vmax.f32 %v1002, %v1010
        %v1025 = vrot.slane %v1024, 4
        %v1026 = vmax.f32 %v1024, %v1025
        %v1027 = vrot.slane %v1026, 2
        %v1028 = vmax.f32 %v1026, %v1027
        %v1029 = vrot.slane %v1028, 1
        %v1030 = vmax.f32 %v1028, %v1029
        %v1031 = vmax.f32 %v1003, %v1011
        %v1032 = vrot.slane %v1031, 4
        %v1033 = vmax.f32 %v1031, %v1032
        %v1034 = vrot.slane %v1033, 2
        %v1035 = vmax.f32 %v1033, %v1034
        %v1036 = vrot.slane %v1035, 1
        %v1037 = vmax.f32 %v1035, %v1036
        %v1038 = vmax.f32 %v1004, %v1012
        %v1039 = vrot.slane %v1038, 4
        %v1040 = vmax.f32 %v1038, %v1039
        %v1041 = vrot.slane %v1040, 2
        %v1042 = vmax.f32 %v1040, %v1041
        %v1043 = vrot.slane %v1042, 1
        %v1044 = vmax.f32 %v1042, %v1043
        %v1045 = vmax.f32 %v1005, %v1013
        %v1046 = vrot.slane %v1045, 4
        %v1047 = vmax.f32 %v1045, %v1046
        %v1048 = vrot.slane %v1047, 2
        %v1049 = vmax.f32 %v1047, %v1048
        %v1050 = vrot.slane %v1049, 1
        %v1051 = vmax.f32 %v1049, %v1050
        %v1052 = vmax.f32 %v1006, %v1014
        %v1053 = vrot.slane %v1052, 4
        %v1054 = vmax.f32 %v1052, %v1053
        %v1055 = vrot.slane %v1054, 2
        %v1056 = vmax.f32 %v1054, %v1055
        %v1057 = vrot.slane %v1056, 1
        %v1058 = vmax.f32 %v1056, %v1057
        %v1059 = vmax.f32 %v1007, %v1015
        %v1060 = vrot.slane %v1059, 4
        %v1061 = vmax.f32 %v1059, %v1060
        %v1062 = vrot.slane %v1061, 2
        %v1063 = vmax.f32 %v1061, %v1062
        %v1064 = vrot.slane %v1063, 1
        %v1065 = vmax.f32 %v1063, %v1064
        %v1066 = vmax.f32 %v1008, %v1016
        %v1067 = vrot.slane %v1066, 4
        %v1068 = vmax.f32 %v1066, %v1067
        %v1069 = vrot.slane %v1068, 2
        %v1070 = vmax.f32 %v1068, %v1069
        %v1071 = vrot.slane %v1070, 1
        %v1072 = vmax.f32 %v1070, %v1071
        %v1073 = vld [vmem:[%s337] sm:$0xff]
        %v1082 = vrot.slane %v1030, 7
        %v1083 = vrot.slane %v1037, 6
        %v1084 = vrot.slane %v1044, 5
        %v1085 = vrot.slane %v1051, 4
        %v1086 = vrot.slane %v1058, 3
        %v1087 = vrot.slane %v1065, 2
        %v1088 = vrot.slane %v1072, 1
        %vm1089 = vcmask 1040384
        %v1090 = vsel %vm1089, %v1023, %v1082
        %vm1091 = vcmask 1042434
        %v1092 = vsel %vm1091, %v1083, %v1084
        %vm1093 = vcmask 1041408
        %v1094 = vsel %vm1093, %v1090, %v1092
        %vm1095 = vcmask 1044484
        %v1096 = vsel %vm1095, %v1085, %v1086
        %vm1097 = vcmask 1046534
        %v1098 = vsel %vm1097, %v1087, %v1088
        %vm1099 = vcmask 1045508
        %v1100 = vsel %vm1099, %v1096, %v1098
        %vm1101 = vcmask 1043456
        %v1102 = vsel %vm1101, %v1094, %v1100
        %v1104 = vmax.f32 %v1073, %v1102
        %1105 = vst [vmem:[%s337] sm:$0xff] %v1104
        %s1106 = sand.u32 %s208, 1
        %s1107 = scalar_lea.sflag [#allocation4], %s1106
        %s1108 = sand.u32 %s208, 1
        %s1109 = smul.addr %s1108, 8
        %s1110 = scalar_lea.vmem [#allocation7], %s1109
        // Predicated region
        $region61: #{tpu_custom_call.1} parent=47 // pred_check
          %p1111 = pneg %p218
        $region62: #{tpu_custom_call.1} parent=47 // pred_check_branch
          %1113 = sbr.rel (%p1111) target = $region64
        $region63: #{tpu_custom_call.1} parent=47 // pred_region
          %s1114 = sadd.s32 %s28, %s29
          %1116 = vsyncadd %s1107, 0
          %s1117 = smul.addr %s1114, 8
          %s1118 = scalar_lea.hbm %s7, %s1117
          %s1120 = sshll.u32 %s1110, 4
          %s1121 = int_to_ptr.vmem [resolvable:$true] %s1120
          %s1122 = sshll.u32 %s1118, 4
          %s1123 = int_to_ptr.hbm [resolvable:$true] %s1122
          %1125 = dma.vmem_to_hbm [thread:$0]  %s1121, 128, %s1123, %s1107
        $region64: #{tpu_custom_call.1} parent=47 // pred_fallthru
          _
      $region48: #{tpu_custom_call.1} parent=5 // pred_fallthru
        _
      %p1126 = scmp.le.s32.totalorder 2, %s18
      // Predicated region
      $region65: #{tpu_custom_call.1} parent=5 // pred_check
        %p1127 = pneg %p1126
      $region66: #{tpu_custom_call.1} parent=5 // pred_check_branch
        %1129 = sbr.rel (%p1127) target = $region68
      $region67: #{tpu_custom_call.1} parent=5 // pred_region
        %s1130 = ssub.s32 %s18, 2
        // Predicated region
        $region69: #{tpu_custom_call.1} parent=67 // pred_check
          %p1131 = pneg %p224
        $region70: #{tpu_custom_call.1} parent=67 // pred_check_branch
          %1133 = sbr.rel (%p1131) target = $region72
        $region71: #{tpu_custom_call.1} parent=67 // pred_region
          %s1134 = sand.u32 %s209, 1
          %s1135 = scalar_lea.sflag [#allocation4], %s1134
          %s1136 = sand.u32 %s209, 1
          %s1137 = smul.addr %s1136, 8
          %s1138 = scalar_lea.vmem [#allocation7], %s1137
          %1140 = dma.done %s1135, 128
        $region72: #{tpu_custom_call.1} parent=67 // pred_fallthru
          _
      $region68: #{tpu_custom_call.1} parent=5 // pred_fallthru
        _
    $region6: #{tpu_custom_call.1} parent=1 // loop_footer
      %s22 = sadd.s32 1, %s18
    $region7: #{tpu_custom_call.1} parent=1 // loop_footer_branch
      %17 = sbr.rel target = $region3
    $region8: #{tpu_custom_call.1} parent=1 // loop_exit
      _
    %1141 = vsyncpa [#allocation3], 1
    %s1142 = scalar_lea.sflag [#allocation3], 1
    %1143 = vsyncpa %s1142, 1
    %1144 = vsyncpa [#allocation6], 1
    %1145 = vsyncpa [#allocation4], 1
    %s1146 = scalar_lea.sflag [#allocation4], 1
    %1147 = vsyncpa %s1146, 1

</llo_original>
